<compile_context>
chip_gen: v6e
topology: v6e:2x2x1
jax: 0.10.0
libtpu: 0.0.40
codegen_flags: <defaults>
</compile_context>

<pallas_src>
import jax
import jax.numpy as jnp
from jax import lax
from jax.experimental import pallas as pl
from jax.experimental.pallas import tpu as pltpu

_LANES = 128                     # lane-dense last dim; zero-copy iff size % 128 == 0
_TARGET_BLOCK_BYTES = 4 << 20    # ~4 MiB per input stream per grid step
_CHUNK_BYTES = 64 << 10          # in-kernel chunk; bounds vreg/VMEM temporaries
_XLA_FALLBACK_ELEMS = 16 * 1024  # tiny activations: fused XLA beats a kernel launch


def _round_down(a, b):
    return (a // b) * b


def _make_qadd_kernel(*, block_rows, rem_rows, chunk_rows, lanes, group):
    """Builds the QAdd kernel specialized to the (static) block geometry.

    block_rows: rows per full grid block.
    rem_rows:   valid rows in the last block (== block_rows if rows divide).
    chunk_rows: rows processed per inner fori_loop iteration.
    """

    def kernel(sc_ref, in_ref, out_ref, stats_ref, min_acc, max_acc):
        i = pl.program_id(0)
        last = pl.num_programs(0) - 1

        # Profiler.__init__: minimum = 1000.0, maximum = -1000.0
        @pl.when(i == 0)
        def _():
            min_acc[...] = jnp.full_like(min_acc, 1000.0)
            max_acc[...] = jnp.full_like(max_acc, -1000.0)

        def process(start, nrows):
            # Add + store one chunk; fold its min/max into the VMEM accumulators
            # with elementwise (VPU) ops only.  `nrows` is always static.
            sc = sc_ref[pl.ds(start, nrows), :]
            x = in_ref[pl.ds(start, nrows), :]
            out = sc + x
            out_ref[pl.ds(start, nrows), :] = out
            for k, v in enumerate((sc, x, out)):   # ShortCut, Input, Output
                vf = v.astype(jnp.float32)
                if nrows % group == 0:
                    vr = vf.reshape(nrows // group, group, lanes)
                    pmin = jnp.min(vr, axis=0)               # (group, lanes)
                    pmax = jnp.max(vr, axis=0)
                else:
                    # Static ragged tail (< group rows): fold to one row,
                    # broadcast-combined into the accumulator.
                    pmin = jnp.min(vf, axis=0, keepdims=True)  # (1, lanes)
                    pmax = jnp.max(vf, axis=0, keepdims=True)
                min_acc[k] = jnp.minimum(min_acc[k], pmin)
                max_acc[k] = jnp.maximum(max_acc[k], pmax)

        def emit_rows(nrows):
            # Statically unpack `nrows` into fori-looped full chunks + one tail.
            n_chunks, tail = divmod(nrows, chunk_rows)
            if n_chunks:
                def body(j, carry):
                    process(pl.multiple_of(j * chunk_rows, chunk_rows), chunk_rows)
                    return carry
                lax.fori_loop(0, n_chunks, body, 0)
            if tail:
                process(n_chunks * chunk_rows, tail)

        if rem_rows == block_rows:
            # Rows divide evenly into blocks: a single path, no gating.
            emit_rows(block_rows)
        else:
            @pl.when(i < last)
            def _():
                emit_rows(block_rows)

            # Partial last block: only the valid rows are read / folded /
            # written (statically specialized — no dynamic masks, no padding).
            @pl.when(i == last)
            def _():
                emit_rows(rem_rows)

        # Single cross-lane (XLU) reduce + SMEM scalar writes, once per kernel.
        @pl.when(i == last)
        def _():
            for k in range(3):
                stats_ref[2 * k] = jnp.min(min_acc[k])
                stats_ref[2 * k + 1] = jnp.max(max_acc[k])

    return kernel


def _qadd_pallas_2d(sc2, x2):
    """Fused add + 3x(min,max) over (rows, 128) arrays. Returns (out2, stats[6])."""
    rows, lanes = sc2.shape
    dtype = sc2.dtype
    itemsize = jnp.dtype(dtype).itemsize
    sub_mult = max(8, 32 // itemsize)        # sublane packing: 8 f32, 16 bf16
    group = 8                                # f32 accumulator sublane group

    target_rows = max(sub_mult,
                      _round_down(_TARGET_BLOCK_BYTES // (lanes * itemsize), sub_mult))
    block_rows = min(target_rows, max(sub_mult, _round_down(rows, sub_mult)))
    chunk_rows = min(block_rows,
                     max(sub_mult,
                         _round_down(_CHUNK_BYTES // (lanes * itemsize), sub_mult)))
    grid_steps = pl.cdiv(rows, block_rows)
    rem_rows = rows - (grid_steps - 1) * block_rows   # valid rows in last block

    kernel = _make_qadd_kernel(block_rows=block_rows, rem_rows=rem_rows,
                               chunk_rows=chunk_rows, lanes=lanes, group=group)

    # VMEM budget: 3 streams x 2 pipeline buffers x block + accumulators/temps.
    # Capped at 32 MiB: within v7x's 64 MiB physical / 32 MiB default scoped
    # VMEM and raises v5e's 16 MiB default when 4 MiB blocks are in play.
    block_bytes = block_rows * lanes * itemsize
    vmem_limit = int(min(max(6 * block_bytes + (8 << 20), 16 << 20), 32 << 20))

    total = rows * lanes
    cost = pl.CostEstimate(flops=7 * total, transcendentals=0,
                           bytes_accessed=3 * total * itemsize + 6 * 4)

    out2, stats = pl.pallas_call(
        kernel,
        out_shape=(
            jax.ShapeDtypeStruct((rows, lanes), dtype),
            jax.ShapeDtypeStruct((6,), jnp.float32),
        ),
        grid_spec=pltpu.PrefetchScalarGridSpec(
            num_scalar_prefetch=0,
            grid=(grid_steps,),
            in_specs=[
                pl.BlockSpec((block_rows, lanes), lambda i: (i, 0)),
                pl.BlockSpec((block_rows, lanes), lambda i: (i, 0)),
            ],
            out_specs=(
                pl.BlockSpec((block_rows, lanes), lambda i: (i, 0)),
                pl.BlockSpec(memory_space=pltpu.SMEM),   # 6 running min/max scalars
            ),
            scratch_shapes=[
                pltpu.VMEM((3, group, lanes), jnp.float32),  # running mins
                pltpu.VMEM((3, group, lanes), jnp.float32),  # running maxs
            ],
        ),
        compiler_params=pltpu.CompilerParams(
            dimension_semantics=("arbitrary",),      # stats carried across steps
            vmem_limit_bytes=vmem_limit),
        cost_estimate=cost,
    )(sc2, x2)
    return out2, stats


def _qadd_small(short_cut, x):
    """Plain-XLA fast path for tiny activations (single fused pass, no launch)."""
    out = short_cut + x

    def mm(v):
        vf = v.astype(jnp.float32)
        return (jnp.minimum(jnp.float32(1000.0), jnp.min(vf)),
                jnp.maximum(jnp.float32(-1000.0), jnp.max(vf)))

    return out, {"ShortCut": mm(short_cut), "Input": mm(x), "Output": mm(out)}


def qadd(short_cut, x, training=False):
    """QAdd.forward. Returns (output, profiler_state dict or None).

    Eval mode (training=False): output = short_cut + input (identity quantizers)
    and the three profilers' min/max for this call, already folded with the
    +1000 / -1000 init values.  Stats are per-call; carry the running min/max
    across calls host-side like the PyTorch Profiler objects do.
    Training mode: profilers/quantizers are skipped entirely (plain add).
    """
    assert short_cut.shape == x.shape and short_cut.dtype == x.dtype
    if training:
        return short_cut + x, None

    orig_shape = short_cut.shape
    total = int(short_cut.size)
    assert total > 0

    if total < _XLA_FALLBACK_ELEMS:
        return _qadd_small(short_cut, x)

    sc_flat = short_cut.reshape(-1)
    x_flat = x.reshape(-1)
    pad = (-total) % _LANES
    if pad:
        # TODO(synk): sub-128 tails: edge-pad replicates existing values so the
        # profiler min/max and the sliced output are exact, but it costs an
        # extra pass over the inputs/output.  Replace with in-kernel 1-D tail
        # handling.  (Do NOT change to a constant pad — that would corrupt the
        # profiler min/max.)
        sc_flat = jnp.pad(sc_flat, (0, pad), mode="edge")
        x_flat = jnp.pad(x_flat, (0, pad), mode="edge")

    rows = (total + pad) // _LANES
    out2, stats = _qadd_pallas_2d(sc_flat.reshape(rows, _LANES),
                                  x_flat.reshape(rows, _LANES))

    out_flat = out2.reshape(-1)
    if pad:
        out_flat = out_flat[:total]
    out = out_flat.reshape(orig_shape)
    profiler = {
        "ShortCut": (stats[0], stats[1]),
        "Input": (stats[2], stats[3]),
        "Output": (stats[4], stats[5]),
    }
    return out, profiler


def _check(name, sc, x, out, prof):
    ref = sc + x
    assert jnp.allclose(out, ref, atol=1e-6), f"{name}: output mismatch"
    pairs = (("ShortCut", sc), ("Input", x), ("Output", ref))
    for key, v in pairs:
        assert jnp.allclose(prof[key][0], jnp.minimum(1000.0, jnp.min(v))), \
            f"{name}: {key} min mismatch"
        assert jnp.allclose(prof[key][1], jnp.maximum(-1000.0, jnp.max(v))), \
            f"{name}: {key} max mismatch"


if __name__ == "__main__":
    key = jax.random.PRNGKey(0)
    keys = jax.random.split(key, 8)

    # 1) Residual-add activation (NCHW), zero-copy Pallas path (size % 128 == 0).
    shape = (2, 64, 16, 16)                      # 32768 elements
    sc = jax.random.normal(keys[0], shape, jnp.float32)
    x = jax.random.normal(keys[1], shape, jnp.float32)
    out, prof = qadd(sc, x, training=False)
    out = jax.block_until_ready(out)
    _check("aligned", sc, x, out, prof)

    # 2) Ragged row count (171 rows of 128): partial last block handled
    #    in-kernel with no host-side pad/slice.
    shape2 = (2, 171, 64)                        # 21888 = 171 * 128 elements
    sc2 = jax.random.normal(keys[2], shape2, jnp.float32)
    x2 = jax.random.normal(keys[3], shape2, jnp.float32)
    out2, prof2 = qadd(sc2, x2)
    out2 = jax.block_until_ready(out2)
    _check("ragged-rows", sc2, x2, out2, prof2)

    # 3) Size not a multiple of 128: edge-pad fallback path (still exact).
    shape3 = (3, 7, 30, 29)                      # 18270 elements
    sc3 = jax.random.normal(keys[4], shape3, jnp.float32)
    x3 = jax.random.normal(keys[5], shape3, jnp.float32)
    out3, prof3 = qadd(sc3, x3)
    out3 = jax.block_until_ready(out3)
    _check("pad-fallback", sc3, x3, out3, prof3)

    # 4) Tiny activation: plain-XLA fast path.
    shape4 = (2, 4, 16, 16)                      # 2048 elements
    sc4 = jax.random.normal(keys[6], shape4, jnp.float32)
    x4 = jax.random.normal(keys[7], shape4, jnp.float32)
    out4, prof4 = qadd(sc4, x4)
    out4 = jax.block_until_ready(out4)
    _check("small-fallback", sc4, x4, out4, prof4)

    # Training mode: plain add, no profiler update.
    out_t, prof_t = qadd(sc, x, training=True)
    assert prof_t is None and jnp.allclose(out_t, sc + x, atol=1e-6)

    print("KERNEL_OK")
</pallas_src>

<mosaic_0001>
module attributes {stable_mosaic.version = 11 : i64} {
  func.func @kernel(%arg0: i32, %arg1: memref<256x128xf32, #tpu.memory_space<vmem>>, %arg2: memref<256x128xf32, #tpu.memory_space<vmem>>, %arg3: memref<256x128xf32, #tpu.memory_space<vmem>>, %arg4: memref<6xf32, #tpu.memory_space<smem>>, %arg5: memref<3x8x128xf32, #tpu.memory_space<vmem>>, %arg6: memref<3x8x128xf32, #tpu.memory_space<vmem>>) attributes {dimension_semantics = [#tpu.dimension_semantics<arbitrary>], iteration_bounds = array<i64: 1>, scalar_prefetch = 0 : i64, scratch_operands = 2 : i64, tpu.core_type = #tpu.core_type<tc>, window_params = [{transform_indices = @transform_0, window_bounds = array<i64: 256, 128>}, {transform_indices = @transform_1, window_bounds = array<i64: 256, 128>}, {transform_indices = @transform_2, window_bounds = array<i64: 256, 128>}, {transform_indices = @transform_3, window_bounds = array<i64: 6>}]} {
    %c0_i32 = arith.constant 0 : i32
    %0 = arith.cmpi eq, %arg0, %c0_i32 : i32
    %1 = arith.extui %0 : i1 to i32
    %c0_i32_0 = arith.constant 0 : i32
    %2 = arith.cmpi ne, %1, %c0_i32_0 : i32
    scf.if %2 {
      %cst = arith.constant 1.000000e+03 : f32
      %7 = vector.broadcast %cst : f32 to vector<3x8x128xf32>
      %c0 = arith.constant 0 : index
      %c0_5 = arith.constant 0 : index
      %c0_6 = arith.constant 0 : index
      %8 = vector.load %arg5[%c0, %c0_5, %c0_6] : memref<3x8x128xf32, #tpu.memory_space<vmem>>, vector<3x8x128xf32>
      tpu.vector_store %arg5[%c0, %c0_5, %c0_6], %7 {strides = array<i32>} : memref<3x8x128xf32, #tpu.memory_space<vmem>>, vector<3x8x128xf32>,
      %cst_7 = arith.constant -1.000000e+03 : f32
      %9 = vector.broadcast %cst_7 : f32 to vector<3x8x128xf32>
      %c0_8 = arith.constant 0 : index
      %c0_9 = arith.constant 0 : index
      %c0_10 = arith.constant 0 : index
      %10 = vector.load %arg6[%c0_8, %c0_9, %c0_10] : memref<3x8x128xf32, #tpu.memory_space<vmem>>, vector<3x8x128xf32>
      tpu.vector_store %arg6[%c0_8, %c0_9, %c0_10], %9 {strides = array<i32>} : memref<3x8x128xf32, #tpu.memory_space<vmem>>, vector<3x8x128xf32>,
    } else {
    }
    %c0_i32_1 = arith.constant 0 : i32
    %c2_i32 = arith.constant 2 : i32
    %3 = arith.addi %c0_i32_1, %c2_i32 : i32
    %c1_i32 = arith.constant 1 : i32
    scf.for %arg7 = %c0_i32_1 to %3 step %c1_i32  : i32 {
      %c128_i32 = arith.constant 128 : i32
      %7 = arith.muli %arg7, %c128_i32 : i32
      %8 = tpu.assume_multiple %7, 128 : i32
      %9 = arith.index_cast %8 : i32 to index
      %c0 = arith.constant 0 : index
      %10 = vector.load %arg1[%9, %c0] : memref<256x128xf32, #tpu.memory_space<vmem>>, vector<128x128xf32>
      %11 = arith.index_cast %8 : i32 to index
      %c0_5 = arith.constant 0 : index
      %12 = vector.load %arg2[%11, %c0_5] : memref<256x128xf32, #tpu.memory_space<vmem>>, vector<128x128xf32>
      %13 = arith.addf %10, %12 : vector<128x128xf32>
      %14 = arith.index_cast %8 : i32 to index
      %c0_6 = arith.constant 0 : index
      %15 = vector.load %arg3[%14, %c0_6] : memref<256x128xf32, #tpu.memory_space<vmem>>, vector<128x128xf32>
      tpu.vector_store %arg3[%14, %c0_6], %13 {strides = array<i32>} : memref<256x128xf32, #tpu.memory_space<vmem>>, vector<128x128xf32>,
      %16 = vector.shape_cast %10 : vector<128x128xf32> to vector<16x8x128xf32>
      %cst = arith.constant dense<0x7F800000> : vector<8x128xf32>
      %17 = vector.multi_reduction <minimumf>, %16, %cst [0] : vector<16x8x128xf32> to vector<8x128xf32>
      %cst_7 = arith.constant dense<0xFF800000> : vector<8x128xf32>
      %18 = vector.multi_reduction <maximumf>, %16, %cst_7 [0] : vector<16x8x128xf32> to vector<8x128xf32>
      %c0_8 = arith.constant 0 : index
      %c0_9 = arith.constant 0 : index
      %c0_10 = arith.constant 0 : index
      %19 = vector.load %arg5[%c0_8, %c0_9, %c0_10] : memref<3x8x128xf32, #tpu.memory_space<vmem>>, vector<1x8x128xf32>
      %20 = vector.shape_cast %19 : vector<1x8x128xf32> to vector<8x128xf32>
      %21 = arith.minimumf %20, %17 : vector<8x128xf32>
      %c0_11 = arith.constant 0 : index
      %c0_12 = arith.constant 0 : index
      %c0_13 = arith.constant 0 : index
      %22 = vector.load %arg5[%c0_11, %c0_12, %c0_13] : memref<3x8x128xf32, #tpu.memory_space<vmem>>, vector<1x8x128xf32>
      %23 = vector.shape_cast %22 : vector<1x8x128xf32> to vector<8x128xf32>
      %24 = vector.shape_cast %21 : vector<8x128xf32> to vector<1x8x128xf32>
      tpu.vector_store %arg5[%c0_11, %c0_12, %c0_13], %24 {strides = array<i32>} : memref<3x8x128xf32, #tpu.memory_space<vmem>>, vector<1x8x128xf32>,
      %c0_14 = arith.constant 0 : index
      %c0_15 = arith.constant 0 : index
      %c0_16 = arith.constant 0 : index
      %25 = vector.load %arg6[%c0_14, %c0_15, %c0_16] : memref<3x8x128xf32, #tpu.memory_space<vmem>>, vector<1x8x128xf32>
      %26 = vector.shape_cast %25 : vector<1x8x128xf32> to vector<8x128xf32>
      %27 = arith.maximumf %26, %18 : vector<8x128xf32>
      %c0_17 = arith.constant 0 : index
      %c0_18 = arith.constant 0 : index
      %c0_19 = arith.constant 0 : index
      %28 = vector.load %arg6[%c0_17, %c0_18, %c0_19] : memref<3x8x128xf32, #tpu.memory_space<vmem>>, vector<1x8x128xf32>
      %29 = vector.shape_cast %28 : vector<1x8x128xf32> to vector<8x128xf32>
      %30 = vector.shape_cast %27 : vector<8x128xf32> to vector<1x8x128xf32>
      tpu.vector_store %arg6[%c0_17, %c0_18, %c0_19], %30 {strides = array<i32>} : memref<3x8x128xf32, #tpu.memory_space<vmem>>, vector<1x8x128xf32>,
      %31 = vector.shape_cast %12 : vector<128x128xf32> to vector<16x8x128xf32>
      %cst_20 = arith.constant dense<0x7F800000> : vector<8x128xf32>
      %32 = vector.multi_reduction <minimumf>, %31, %cst_20 [0] : vector<16x8x128xf32> to vector<8x128xf32>
      %cst_21 = arith.constant dense<0xFF800000> : vector<8x128xf32>
      %33 = vector.multi_reduction <maximumf>, %31, %cst_21 [0] : vector<16x8x128xf32> to vector<8x128xf32>
      %c1 = arith.constant 1 : index
      %c0_22 = arith.constant 0 : index
      %c0_23 = arith.constant 0 : index
      %34 = vector.load %arg5[%c1, %c0_22, %c0_23] : memref<3x8x128xf32, #tpu.memory_space<vmem>>, vector<1x8x128xf32>
      %35 = vector.shape_cast %34 : vector<1x8x128xf32> to vector<8x128xf32>
      %36 = arith.minimumf %35, %32 : vector<8x128xf32>
      %c1_24 = arith.constant 1 : index
      %c0_25 = arith.constant 0 : index
      %c0_26 = arith.constant 0 : index
      %37 = vector.load %arg5[%c1_24, %c0_25, %c0_26] : memref<3x8x128xf32, #tpu.memory_space<vmem>>, vector<1x8x128xf32>
      %38 = vector.shape_cast %37 : vector<1x8x128xf32> to vector<8x128xf32>
      %39 = vector.shape_cast %36 : vector<8x128xf32> to vector<1x8x128xf32>
      tpu.vector_store %arg5[%c1_24, %c0_25, %c0_26], %39 {strides = array<i32>} : memref<3x8x128xf32, #tpu.memory_space<vmem>>, vector<1x8x128xf32>,
      %c1_27 = arith.constant 1 : index
      %c0_28 = arith.constant 0 : index
      %c0_29 = arith.constant 0 : index
      %40 = vector.load %arg6[%c1_27, %c0_28, %c0_29] : memref<3x8x128xf32, #tpu.memory_space<vmem>>, vector<1x8x128xf32>
      %41 = vector.shape_cast %40 : vector<1x8x128xf32> to vector<8x128xf32>
      %42 = arith.maximumf %41, %33 : vector<8x128xf32>
      %c1_30 = arith.constant 1 : index
      %c0_31 = arith.constant 0 : index
      %c0_32 = arith.constant 0 : index
      %43 = vector.load %arg6[%c1_30, %c0_31, %c0_32] : memref<3x8x128xf32, #tpu.memory_space<vmem>>, vector<1x8x128xf32>
      %44 = vector.shape_cast %43 : vector<1x8x128xf32> to vector<8x128xf32>
      %45 = vector.shape_cast %42 : vector<8x128xf32> to vector<1x8x128xf32>
      tpu.vector_store %arg6[%c1_30, %c0_31, %c0_32], %45 {strides = array<i32>} : memref<3x8x128xf32, #tpu.memory_space<vmem>>, vector<1x8x128xf32>,
      %46 = vector.shape_cast %13 : vector<128x128xf32> to vector<16x8x128xf32>
      %cst_33 = arith.constant dense<0x7F800000> : vector<8x128xf32>
      %47 = vector.multi_reduction <minimumf>, %46, %cst_33 [0] : vector<16x8x128xf32> to vector<8x128xf32>
      %cst_34 = arith.constant dense<0xFF800000> : vector<8x128xf32>
      %48 = vector.multi_reduction <maximumf>, %46, %cst_34 [0] : vector<16x8x128xf32> to vector<8x128xf32>
      %c2 = arith.constant 2 : index
      %c0_35 = arith.constant 0 : index
      %c0_36 = arith.constant 0 : index
      %49 = vector.load %arg5[%c2, %c0_35, %c0_36] : memref<3x8x128xf32, #tpu.memory_space<vmem>>, vector<1x8x128xf32>
      %50 = vector.shape_cast %49 : vector<1x8x128xf32> to vector<8x128xf32>
      %51 = arith.minimumf %50, %47 : vector<8x128xf32>
      %c2_37 = arith.constant 2 : index
      %c0_38 = arith.constant 0 : index
      %c0_39 = arith.constant 0 : index
      %52 = vector.load %arg5[%c2_37, %c0_38, %c0_39] : memref<3x8x128xf32, #tpu.memory_space<vmem>>, vector<1x8x128xf32>
      %53 = vector.shape_cast %52 : vector<1x8x128xf32> to vector<8x128xf32>
      %54 = vector.shape_cast %51 : vector<8x128xf32> to vector<1x8x128xf32>
      tpu.vector_store %arg5[%c2_37, %c0_38, %c0_39], %54 {strides = array<i32>} : memref<3x8x128xf32, #tpu.memory_space<vmem>>, vector<1x8x128xf32>,
      %c2_40 = arith.constant 2 : index
      %c0_41 = arith.constant 0 : index
      %c0_42 = arith.constant 0 : index
      %55 = vector.load %arg6[%c2_40, %c0_41, %c0_42] : memref<3x8x128xf32, #tpu.memory_space<vmem>>, vector<1x8x128xf32>
      %56 = vector.shape_cast %55 : vector<1x8x128xf32> to vector<8x128xf32>
      %57 = arith.maximumf %56, %48 : vector<8x128xf32>
      %c2_43 = arith.constant 2 : index
      %c0_44 = arith.constant 0 : index
      %c0_45 = arith.constant 0 : index
      %58 = vector.load %arg6[%c2_43, %c0_44, %c0_45] : memref<3x8x128xf32, #tpu.memory_space<vmem>>, vector<1x8x128xf32>
      %59 = vector.shape_cast %58 : vector<1x8x128xf32> to vector<8x128xf32>
      %60 = vector.shape_cast %57 : vector<8x128xf32> to vector<1x8x128xf32>
      tpu.vector_store %arg6[%c2_43, %c0_44, %c0_45], %60 {strides = array<i32>} : memref<3x8x128xf32, #tpu.memory_space<vmem>>, vector<1x8x128xf32>,
    }
    %c2_i32_2 = arith.constant 2 : i32
    %c0_i32_3 = arith.constant 0 : i32
    %4 = arith.cmpi eq, %arg0, %c0_i32_3 : i32
    %5 = arith.extui %4 : i1 to i32
    %c0_i32_4 = arith.constant 0 : i32
    %6 = arith.cmpi ne, %5, %c0_i32_4 : i32
    scf.if %6 {
      %c0 = arith.constant 0 : index
      %c0_5 = arith.constant 0 : index
      %c0_6 = arith.constant 0 : index
      %7 = vector.load %arg5[%c0, %c0_5, %c0_6] : memref<3x8x128xf32, #tpu.memory_space<vmem>>, vector<1x8x128xf32>
      %8 = vector.shape_cast %7 : vector<1x8x128xf32> to vector<8x128xf32>
      %9 = vector.shape_cast %8 : vector<8x128xf32> to vector<1x8x128xf32>
      %cst = arith.constant dense<0x7F800000> : vector<1xf32>
      %10 = vector.multi_reduction <minimumf>, %9, %cst [1, 2] : vector<1x8x128xf32> to vector<1xf32>
      %11 = vector.shape_cast %10 : vector<1xf32> to vector<1x1x1xf32>
      %12 = vector.extract %11[0, 0, 0] : f32 from vector<1x1x1xf32>
      %c0_7 = arith.constant 0 : index
      %13 = memref.load %arg4[%c0_7] : memref<6xf32, #tpu.memory_space<smem>>
      memref.store %12, %arg4[%c0_7] : memref<6xf32, #tpu.memory_space<smem>>
      %c0_8 = arith.constant 0 : index
      %c0_9 = arith.constant 0 : index
      %c0_10 = arith.constant 0 : index
      %14 = vector.load %arg6[%c0_8, %c0_9, %c0_10] : memref<3x8x128xf32, #tpu.memory_space<vmem>>, vector<1x8x128xf32>
      %15 = vector.shape_cast %14 : vector<1x8x128xf32> to vector<8x128xf32>
      %16 = vector.shape_cast %15 : vector<8x128xf32> to vector<1x8x128xf32>
      %cst_11 = arith.constant dense<0xFF800000> : vector<1xf32>
      %17 = vector.multi_reduction <maximumf>, %16, %cst_11 [1, 2] : vector<1x8x128xf32> to vector<1xf32>
      %18 = vector.shape_cast %17 : vector<1xf32> to vector<1x1x1xf32>
      %19 = vector.extract %18[0, 0, 0] : f32 from vector<1x1x1xf32>
      %c1 = arith.constant 1 : index
      %20 = memref.load %arg4[%c1] : memref<6xf32, #tpu.memory_space<smem>>
      memref.store %19, %arg4[%c1] : memref<6xf32, #tpu.memory_space<smem>>
      %c1_12 = arith.constant 1 : index
      %c0_13 = arith.constant 0 : index
      %c0_14 = arith.constant 0 : index
      %21 = vector.load %arg5[%c1_12, %c0_13, %c0_14] : memref<3x8x128xf32, #tpu.memory_space<vmem>>, vector<1x8x128xf32>
      %22 = vector.shape_cast %21 : vector<1x8x128xf32> to vector<8x128xf32>
      %23 = vector.shape_cast %22 : vector<8x128xf32> to vector<1x8x128xf32>
      %cst_15 = arith.constant dense<0x7F800000> : vector<1xf32>
      %24 = vector.multi_reduction <minimumf>, %23, %cst_15 [1, 2] : vector<1x8x128xf32> to vector<1xf32>
      %25 = vector.shape_cast %24 : vector<1xf32> to vector<1x1x1xf32>
      %26 = vector.extract %25[0, 0, 0] : f32 from vector<1x1x1xf32>
      %c2 = arith.constant 2 : index
      %27 = memref.load %arg4[%c2] : memref<6xf32, #tpu.memory_space<smem>>
      memref.store %26, %arg4[%c2] : memref<6xf32, #tpu.memory_space<smem>>
      %c1_16 = arith.constant 1 : index
      %c0_17 = arith.constant 0 : index
      %c0_18 = arith.constant 0 : index
      %28 = vector.load %arg6[%c1_16, %c0_17, %c0_18] : memref<3x8x128xf32, #tpu.memory_space<vmem>>, vector<1x8x128xf32>
      %29 = vector.shape_cast %28 : vector<1x8x128xf32> to vector<8x128xf32>
      %30 = vector.shape_cast %29 : vector<8x128xf32> to vector<1x8x128xf32>
      %cst_19 = arith.constant dense<0xFF800000> : vector<1xf32>
      %31 = vector.multi_reduction <maximumf>, %30, %cst_19 [1, 2] : vector<1x8x128xf32> to vector<1xf32>
      %32 = vector.shape_cast %31 : vector<1xf32> to vector<1x1x1xf32>
      %33 = vector.extract %32[0, 0, 0] : f32 from vector<1x1x1xf32>
      %c3 = arith.constant 3 : index
      %34 = memref.load %arg4[%c3] : memref<6xf32, #tpu.memory_space<smem>>
      memref.store %33, %arg4[%c3] : memref<6xf32, #tpu.memory_space<smem>>
      %c2_20 = arith.constant 2 : index
      %c0_21 = arith.constant 0 : index
      %c0_22 = arith.constant 0 : index
      %35 = vector.load %arg5[%c2_20, %c0_21, %c0_22] : memref<3x8x128xf32, #tpu.memory_space<vmem>>, vector<1x8x128xf32>
      %36 = vector.shape_cast %35 : vector<1x8x128xf32> to vector<8x128xf32>
      %37 = vector.shape_cast %36 : vector<8x128xf32> to vector<1x8x128xf32>
      %cst_23 = arith.constant dense<0x7F800000> : vector<1xf32>
      %38 = vector.multi_reduction <minimumf>, %37, %cst_23 [1, 2] : vector<1x8x128xf32> to vector<1xf32>
      %39 = vector.shape_cast %38 : vector<1xf32> to vector<1x1x1xf32>
      %40 = vector.extract %39[0, 0, 0] : f32 from vector<1x1x1xf32>
      %c4 = arith.constant 4 : index
      %41 = memref.load %arg4[%c4] : memref<6xf32, #tpu.memory_space<smem>>
      memref.store %40, %arg4[%c4] : memref<6xf32, #tpu.memory_space<smem>>
      %c2_24 = arith.constant 2 : index
      %c0_25 = arith.constant 0 : index
      %c0_26 = arith.constant 0 : index
      %42 = vector.load %arg6[%c2_24, %c0_25, %c0_26] : memref<3x8x128xf32, #tpu.memory_space<vmem>>, vector<1x8x128xf32>
      %43 = vector.shape_cast %42 : vector<1x8x128xf32> to vector<8x128xf32>
      %44 = vector.shape_cast %43 : vector<8x128xf32> to vector<1x8x128xf32>
      %cst_27 = arith.constant dense<0xFF800000> : vector<1xf32>
      %45 = vector.multi_reduction <maximumf>, %44, %cst_27 [1, 2] : vector<1x8x128xf32> to vector<1xf32>
      %46 = vector.shape_cast %45 : vector<1xf32> to vector<1x1x1xf32>
      %47 = vector.extract %46[0, 0, 0] : f32 from vector<1x1x1xf32>
      %c5 = arith.constant 5 : index
      %48 = memref.load %arg4[%c5] : memref<6xf32, #tpu.memory_space<smem>>
      memref.store %47, %arg4[%c5] : memref<6xf32, #tpu.memory_space<smem>>
    } else {
    }
    return
  }
  func.func @transform_0(%arg0: i32) -> (i32, i32) {
    %c0_i32 = arith.constant 0 : i32
    %c0_i32_0 = arith.constant 0 : i32
    return %arg0, %c0_i32 : i32, i32
  }
  func.func @transform_1(%arg0: i32) -> (i32, i32) {
    %c0_i32 = arith.constant 0 : i32
    %c0_i32_0 = arith.constant 0 : i32
    return %arg0, %c0_i32 : i32, i32
  }
  func.func @transform_2(%arg0: i32) -> (i32, i32) {
    %c0_i32 = arith.constant 0 : i32
    %c0_i32_0 = arith.constant 0 : i32
    return %arg0, %c0_i32 : i32, i32
  }
  func.func @transform_3(%arg0: i32) -> i32 {
    %c0_i32 = arith.constant 0 : i32
    %c0_i32_0 = arith.constant 0 : i32
    return %c0_i32 : i32
  }
}

</mosaic_0001>

<llo_original>
// kernel: tpu_custom_call.1
$region0: #{tpu_custom_call.1}
  #allocation0 [shape = 'u32[]', space=smem, size = 0x4, offset = 0x4, fixed_abs, tag = 'smem constant byte address 0x4 - core index']
  #allocation1 [shape = 'u32[144,128]{1,0:T(1,128)}', space=vmem, size = 0x12000, scoped, tag = 'internal scratch']
  #allocation2 [shape = 'f32[3,8,128]{2,1,0:T(8,128)}', space=vmem, size = 0x3000, scoped, tag = 'scratch operand']
  #allocation3 [shape = 'f32[3,8,128]{2,1,0:T(8,128)}', space=vmem, size = 0x3000, scoped, tag = 'scratch operand']
  %s0 = inlined_call_operand.hbm [shape: f32[256,128], index: 0, kind: input, shape index: {}]
  %s1 = inlined_call_operand.hbm [shape: f32[256,128], index: 1, kind: input, shape index: {}]
  %s2 = inlined_call_operand.hbm [shape: f32[256,128], index: 2, kind: output, shape index: {0}]
  %s3 = inlined_call_operand.hbm [shape: f32[6], index: 3, kind: output, shape index: {1}]
  %4 = xla_tuple %s2, %s3
  %s5 = sld [smem:[#allocation0]]
  $region49: #{tpu_custom_call.1} parent=0
    _
  %s7 = ssub.s32 1, %s5
  %s8 = scalar_select 0, %s7, %s5
  $region1: #{tpu_custom_call.1} parent=0
    #allocation4 [shape = 'u8[131072]{0}', space=vmem, size = 0x20000, scoped, tag = 'input window, operand 0, single buffered']
    #allocation5 [shape = 's32[1]{0}', space=sflag, size = 0x4, scoped, tag = 'scoped memory for tpu_custom_call.1']
    #allocation6 [shape = 's32[1]{0}', space=sflag, size = 0x4, scoped, tag = 'scoped memory for tpu_custom_call.1']
    #allocation7 [shape = 's32[1]{0}', space=sflag, size = 0x4, scoped, tag = 'scoped memory for tpu_custom_call.1']
    #allocation8 [shape = 'u8[131072]{0}', space=vmem, size = 0x20000, scoped, tag = 'input window, operand 1, single buffered']
    #allocation9 [shape = 's32[1]{0}', space=sflag, size = 0x4, scoped, tag = 'scoped memory for tpu_custom_call.1']
    #allocation10 [shape = 'u8[131072]{0}', space=vmem, size = 0x20000, scoped, tag = 'output window, operand 0, single buffered']
    #allocation11 [shape = 'u8[512]{0}', space=smem, size = 0x200, scoped, tag = 'output window, operand 1, single buffered']
    %9 = vsyncpa [#allocation5], 0
    %10 = vsyncpa [#allocation9], 0
    %11 = vsyncpa [#allocation6], 0
    %12 = vsyncpa [#allocation7], 0
    // Predicated region
    $region2: #{tpu_custom_call.1} parent=1 // pred_check
      _
    $region3: #{tpu_custom_call.1} parent=1 // pred_check_branch
      %14 = sbr.rel (0) target = $region5
    $region4: #{tpu_custom_call.1} parent=1 // pred_region
      %s16 = ssub.s32 4096, 4096
      %17 = vsyncadd [#allocation5], %s16
      %s18 = sshll.u32 [#allocation4], 4
      %s19 = int_to_ptr.vmem [resolvable:$true] %s18
      %24 = dma.hbm_to_vmem [thread:$0]  %s0, 4096, %s19, [#allocation5], 128, 128, 8
    $region5: #{tpu_custom_call.1} parent=1 // pred_fallthru
      _
    // Predicated region
    $region6: #{tpu_custom_call.1} parent=1 // pred_check
      _
    $region7: #{tpu_custom_call.1} parent=1 // pred_check_branch
      %26 = sbr.rel (0) target = $region9
    $region8: #{tpu_custom_call.1} parent=1 // pred_region
      %s28 = ssub.s32 4096, 4096
      %29 = vsyncadd [#allocation9], %s28
      %s30 = sshll.u32 [#allocation8], 4
      %s31 = int_to_ptr.vmem [resolvable:$true] %s30
      %36 = dma.hbm_to_vmem [thread:$0]  %s1, 4096, %s31, [#allocation9], 128, 128, 8
    $region9: #{tpu_custom_call.1} parent=1 // pred_fallthru
      _
    // Predicated region
    $region10: #{tpu_custom_call.1} parent=1 // pred_check
      _
    $region11: #{tpu_custom_call.1} parent=1 // pred_check_branch
      %38 = sbr.rel (0) target = $region13
    $region12: #{tpu_custom_call.1} parent=1 // pred_region
      %39 = dma.done [#allocation5], 4096
    $region13: #{tpu_custom_call.1} parent=1 // pred_fallthru
      _
    // Predicated region
    $region14: #{tpu_custom_call.1} parent=1 // pred_check
      _
    $region15: #{tpu_custom_call.1} parent=1 // pred_check_branch
      %41 = sbr.rel (0) target = $region17
    $region16: #{tpu_custom_call.1} parent=1 // pred_region
      %42 = dma.done [#allocation9], 4096
    $region17: #{tpu_custom_call.1} parent=1 // pred_fallthru
      _
    %p43 = scmp.eq.s32.totalorder 0, 0
    // Predicated region
    $region18: #{tpu_custom_call.1} parent=1 // pred_check
      %p44 = pneg %p43
    $region19: #{tpu_custom_call.1} parent=1 // pred_check_branch
      %46 = sbr.rel (%p44) target = $region21
    $region20: #{tpu_custom_call.1} parent=1 // pred_region
      %47 = vst [vmem:[#allocation2] sm:$0xff] 1000.0
      %48 = vst [vmem:[#allocation2 + $0x8] sm:$0xff] 1000.0
      %49 = vst [vmem:[#allocation2 + $0x10] sm:$0xff] 1000.0
      %50 = vst [vmem:[#allocation3] sm:$0xff] -1000.0
      %51 = vst [vmem:[#allocation3 + $0x8] sm:$0xff] -1000.0
      %52 = vst [vmem:[#allocation3 + $0x10] sm:$0xff] -1000.0
    $region21: #{tpu_custom_call.1} parent=1 // pred_fallthru
      _
    loop: start=0, step=1, limit=2
    $region22: #{tpu_custom_call.1} parent=1 // loop_pre_header
      _
    $region23: #{tpu_custom_call.1} parent=1 // loop_header
      %s54 = sphi 0, %s58
      %p55 = scmp.ge.s32.totalorder %s54, 2
    $region24: #{tpu_custom_call.1} parent=1 // loop_header_branch
      %57 = sbr.rel (%p55) target = $region28
    $region25: #{tpu_custom_call.1} parent=1 // loop_body
      %s59 = smul.u32 %s54, 128
      %s60 = scalar_lea.vmem [#allocation4], %s59
      %v61 = vld [vmem:[%s60] sm:$0xff]
      %v62 = vld [vmem:[%s60 + $0x8] sm:$0xff]
      %v63 = vld [vmem:[%s60 + $0x10] sm:$0xff]
      %v64 = vld [vmem:[%s60 + $0x18] sm:$0xff]
      %v65 = vld [vmem:[%s60 + $0x20] sm:$0xff]
      %v66 = vld [vmem:[%s60 + $0x28] sm:$0xff]
      %v67 = vld [vmem:[%s60 + $0x30] sm:$0xff]
      %v68 = vld [vmem:[%s60 + $0x38] sm:$0xff]
      %v69 = vld [vmem:[%s60 + $0x40] sm:$0xff]
      %v70 = vld [vmem:[%s60 + $0x48] sm:$0xff]
      %v71 = vld [vmem:[%s60 + $0x50] sm:$0xff]
      %v72 = vld [vmem:[%s60 + $0x58] sm:$0xff]
      %v73 = vld [vmem:[%s60 + $0x60] sm:$0xff]
      %v74 = vld [vmem:[%s60 + $0x68] sm:$0xff]
      %v75 = vld [vmem:[%s60 + $0x70] sm:$0xff]
      %v76 = vld [vmem:[%s60 + $0x78] sm:$0xff]
      %s77 = scalar_lea.vmem [#allocation8], %s59
      %v78 = vld [vmem:[%s77] sm:$0xff]
      %v79 = vld [vmem:[%s77 + $0x8] sm:$0xff]
      %v80 = vld [vmem:[%s77 + $0x10] sm:$0xff]
      %v81 = vld [vmem:[%s77 + $0x18] sm:$0xff]
      %v82 = vld [vmem:[%s77 + $0x20] sm:$0xff]
      %v83 = vld [vmem:[%s77 + $0x28] sm:$0xff]
      %v84 = vld [vmem:[%s77 + $0x30] sm:$0xff]
      %v85 = vld [vmem:[%s77 + $0x38] sm:$0xff]
      %v86 = vld [vmem:[%s77 + $0x40] sm:$0xff]
      %v87 = vld [vmem:[%s77 + $0x48] sm:$0xff]
      %v88 = vld [vmem:[%s77 + $0x50] sm:$0xff]
      %v89 = vld [vmem:[%s77 + $0x58] sm:$0xff]
      %v90 = vld [vmem:[%s77 + $0x60] sm:$0xff]
      %v91 = vld [vmem:[%s77 + $0x68] sm:$0xff]
      %v92 = vld [vmem:[%s77 + $0x70] sm:$0xff]
      %v93 = vld [vmem:[%s77 + $0x78] sm:$0xff]
      %v94 = vadd.f32 %v61, %v78
      %v95 = vadd.f32 %v62, %v79
      %v96 = vadd.f32 %v63, %v80
      %v97 = vadd.f32 %v64, %v81
      %v98 = vadd.f32 %v65, %v82
      %v99 = vadd.f32 %v66, %v83
      %v100 = vadd.f32 %v67, %v84
      %v101 = vadd.f32 %v68, %v85
      %v102 = vadd.f32 %v69, %v86
      %v103 = vadd.f32 %v70, %v87
      %v104 = vadd.f32 %v71, %v88
      %v105 = vadd.f32 %v72, %v89
      %v106 = vadd.f32 %v73, %v90
      %v107 = vadd.f32 %v74, %v91
      %v108 = vadd.f32 %v75, %v92
      %v109 = vadd.f32 %v76, %v93
      %s110 = scalar_lea.vmem [#allocation10], %s59
      %111 = vst [vmem:[%s110] sm:$0xff] %v94
      %112 = vst [vmem:[%s110 + $0x8] sm:$0xff] %v95
      %113 = vst [vmem:[%s110 + $0x10] sm:$0xff] %v96
      %114 = vst [vmem:[%s110 + $0x18] sm:$0xff] %v97
      %115 = vst [vmem:[%s110 + $0x20] sm:$0xff] %v98
      %116 = vst [vmem:[%s110 + $0x28] sm:$0xff] %v99
      %117 = vst [vmem:[%s110 + $0x30] sm:$0xff] %v100
      %118 = vst [vmem:[%s110 + $0x38] sm:$0xff] %v101
      %119 = vst [vmem:[%s110 + $0x40] sm:$0xff] %v102
      %120 = vst [vmem:[%s110 + $0x48] sm:$0xff] %v103
      %121 = vst [vmem:[%s110 + $0x50] sm:$0xff] %v104
      %122 = vst [vmem:[%s110 + $0x58] sm:$0xff] %v105
      %123 = vst [vmem:[%s110 + $0x60] sm:$0xff] %v106
      %124 = vst [vmem:[%s110 + $0x68] sm:$0xff] %v107
      %125 = vst [vmem:[%s110 + $0x70] sm:$0xff] %v108
      %126 = vst [vmem:[%s110 + $0x78] sm:$0xff] %v109
      %v127 = vmin.f32 %v61, %v65
      %v128 = vmin.f32 %v62, %v66
      %v129 = vmin.f32 %v63, %v67
      %v130 = vmin.f32 %v64, %v68
      %v131 = vmin.f32 %v127, %v69
      %v132 = vmin.f32 %v128, %v70
      %v133 = vmin.f32 %v129, %v71
      %v134 = vmin.f32 %v130, %v72
      %v135 = vmin.f32 %v131, %v73
      %v136 = vmin.f32 %v132, %v74
      %v137 = vmin.f32 %v133, %v75
      %v138 = vmin.f32 %v134, %v76
      %v139 = vmin.f32 %v135, %v136
      %v140 = vmin.f32 %v137, %v138
      %v141 = vmin.f32 %v139, %v140
      %v142 = vmax.f32 %v61, %v65
      %v143 = vmax.f32 %v62, %v66
      %v144 = vmax.f32 %v63, %v67
      %v145 = vmax.f32 %v64, %v68
      %v146 = vmax.f32 %v142, %v69
      %v147 = vmax.f32 %v143, %v70
      %v148 = vmax.f32 %v144, %v71
      %v149 = vmax.f32 %v145, %v72
      %v150 = vmax.f32 %v146, %v73
      %v151 = vmax.f32 %v147, %v74
      %v152 = vmax.f32 %v148, %v75
      %v153 = vmax.f32 %v149, %v76
      %v154 = vmax.f32 %v150, %v151
      %v155 = vmax.f32 %v152, %v153
      %v156 = vmax.f32 %v154, %v155
      %v157 = vld [vmem:[#allocation2] sm:$0xff]
      %v158 = vmin.f32 %v157, %v141
      %159 = vst [vmem:[#allocation2] sm:$0xff] %v158
      %v160 = vld [vmem:[#allocation3] sm:$0xff]
      %v161 = vmax.f32 %v160, %v156
      %162 = vst [vmem:[#allocation3] sm:$0xff] %v161
      %v163 = vmin.f32 %v78, %v82
      %v164 = vmin.f32 %v79, %v83
      %v165 = vmin.f32 %v80, %v84
      %v166 = vmin.f32 %v81, %v85
      %v167 = vmin.f32 %v163, %v86
      %v168 = vmin.f32 %v164, %v87
      %v169 = vmin.f32 %v165, %v88
      %v170 = vmin.f32 %v166, %v89
      %v171 = vmin.f32 %v167, %v90
      %v172 = vmin.f32 %v168, %v91
      %v173 = vmin.f32 %v169, %v92
      %v174 = vmin.f32 %v170, %v93
      %v175 = vmin.f32 %v171, %v172
      %v176 = vmin.f32 %v173, %v174
      %v177 = vmin.f32 %v175, %v176
      %v178 = vmax.f32 %v78, %v82
      %v179 = vmax.f32 %v79, %v83
      %v180 = vmax.f32 %v80, %v84
      %v181 = vmax.f32 %v81, %v85
      %v182 = vmax.f32 %v178, %v86
      %v183 = vmax.f32 %v179, %v87
      %v184 = vmax.f32 %v180, %v88
      %v185 = vmax.f32 %v181, %v89
      %v186 = vmax.f32 %v182, %v90
      %v187 = vmax.f32 %v183, %v91
      %v188 = vmax.f32 %v184, %v92
      %v189 = vmax.f32 %v185, %v93
      %v190 = vmax.f32 %v186, %v187
      %v191 = vmax.f32 %v188, %v189
      %v192 = vmax.f32 %v190, %v191
      %s193 = scalar_lea.vmem [#allocation2], 8
      %v194 = vld [vmem:[%s193] sm:$0xff]
      %v195 = vmin.f32 %v194, %v177
      %196 = vst [vmem:[%s193] sm:$0xff] %v195
      %s197 = scalar_lea.vmem [#allocation3], 8
      %v198 = vld [vmem:[%s197] sm:$0xff]
      %v199 = vmax.f32 %v198, %v192
      %200 = vst [vmem:[%s197] sm:$0xff] %v199
      %v201 = vmin.f32 %v94, %v98
      %v202 = vmin.f32 %v95, %v99
      %v203 = vmin.f32 %v96, %v100
      %v204 = vmin.f32 %v97, %v101
      %v205 = vmin.f32 %v201, %v102
      %v206 = vmin.f32 %v202, %v103
      %v207 = vmin.f32 %v203, %v104
      %v208 = vmin.f32 %v204, %v105
      %v209 = vmin.f32 %v205, %v106
      %v210 = vmin.f32 %v206, %v107
      %v211 = vmin.f32 %v207, %v108
      %v212 = vmin.f32 %v208, %v109
      %v213 = vmin.f32 %v209, %v210
      %v214 = vmin.f32 %v211, %v212
      %v215 = vmin.f32 %v213, %v214
      %v216 = vmax.f32 %v94, %v98
      %v217 = vmax.f32 %v95, %v99
      %v218 = vmax.f32 %v96, %v100
      %v219 = vmax.f32 %v97, %v101
      %v220 = vmax.f32 %v216, %v102
      %v221 = vmax.f32 %v217, %v103
      %v222 = vmax.f32 %v218, %v104
      %v223 = vmax.f32 %v219, %v105
      %v224 = vmax.f32 %v220, %v106
      %v225 = vmax.f32 %v221, %v107
      %v226 = vmax.f32 %v222, %v108
      %v227 = vmax.f32 %v223, %v109
      %v228 = vmax.f32 %v224, %v225
      %v229 = vmax.f32 %v226, %v227
      %v230 = vmax.f32 %v228, %v229
      %s231 = scalar_lea.vmem [#allocation2], 16
      %v232 = vld [vmem:[%s231] sm:$0xff]
      %v233 = vmin.f32 %v232, %v215
      %234 = vst [vmem:[%s231] sm:$0xff] %v233
      %s235 = scalar_lea.vmem [#allocation3], 16
      %v236 = vld [vmem:[%s235] sm:$0xff]
      %v237 = vmax.f32 %v236, %v230
      %238 = vst [vmem:[%s235] sm:$0xff] %v237
    $region26: #{tpu_custom_call.1} parent=1 // loop_footer
      %s58 = sadd.s32 1, %s54
    $region27: #{tpu_custom_call.1} parent=1 // loop_footer_branch
      %53 = sbr.rel target = $region23
    $region28: #{tpu_custom_call.1} parent=1 // loop_exit
      _
    // Predicated region
    $region29: #{tpu_custom_call.1} parent=1 // pred_check
      %p239 = pneg %p43
    $region30: #{tpu_custom_call.1} parent=1 // pred_check_branch
      %241 = sbr.rel (%p239) target = $region32
    $region31: #{tpu_custom_call.1} parent=1 // pred_region
      %v242 = vld [vmem:[#allocation2] sm:$0xff]
      %243 = vmin.xlane.f32.xlu0 %v242
      %v244 = vpop.xlane.xlu0 %243
      %v245 = vrot.slane %v244, 4
      %v246 = vmin.f32 %v244, %v245
      %v247 = vrot.slane %v246, 2
      %v248 = vmin.f32 %v246, %v247
      %v249 = vrot.slane %v248, 1
      %v250 = vmin.f32 %v248, %v249
      %s251 = vtos %v250
      %s252 = scalar_lea.smem [#allocation11], 0
      %253 = sst [smem:[%s252]] %s251
      %v254 = vld [vmem:[#allocation3] sm:$0xff]
      %255 = vmax.xlane.f32.xlu0 %v254
      %v256 = vpop.xlane.xlu0 %255
      %v257 = vrot.slane %v256, 4
      %v258 = vmax.f32 %v256, %v257
      %v259 = vrot.slane %v258, 2
      %v260 = vmax.f32 %v258, %v259
      %v261 = vrot.slane %v260, 1
      %v262 = vmax.f32 %v260, %v261
      %s263 = vtos %v262
      %s264 = scalar_lea.smem [#allocation11], 1
      %265 = sst [smem:[%s264]] %s263
      %s266 = scalar_lea.vmem [#allocation2], 8
      %v267 = vld [vmem:[%s266] sm:$0xff]
      %268 = vmin.xlane.f32.xlu0 %v267
      %v269 = vpop.xlane.xlu0 %268
      %v270 = vrot.slane %v269, 4
      %v271 = vmin.f32 %v269, %v270
      %v272 = vrot.slane %v271, 2
      %v273 = vmin.f32 %v271, %v272
      %v274 = vrot.slane %v273, 1
      %v275 = vmin.f32 %v273, %v274
      %s276 = vtos %v275
      %s277 = scalar_lea.smem [#allocation11], 2
      %278 = sst [smem:[%s277]] %s276
      %s279 = scalar_lea.vmem [#allocation3], 8
      %v280 = vld [vmem:[%s279] sm:$0xff]
      %281 = vmax.xlane.f32.xlu0 %v280
      %v282 = vpop.xlane.xlu0 %281
      %v283 = vrot.slane %v282, 4
      %v284 = vmax.f32 %v282, %v283
      %v285 = vrot.slane %v284, 2
      %v286 = vmax.f32 %v284, %v285
      %v287 = vrot.slane %v286, 1
      %v288 = vmax.f32 %v286, %v287
      %s289 = vtos %v288
      %s290 = scalar_lea.smem [#allocation11], 3
      %291 = sst [smem:[%s290]] %s289
      %s292 = scalar_lea.vmem [#allocation2], 16
      %v293 = vld [vmem:[%s292] sm:$0xff]
      %294 = vmin.xlane.f32.xlu0 %v293
      %v295 = vpop.xlane.xlu0 %294
      %v296 = vrot.slane %v295, 4
      %v297 = vmin.f32 %v295, %v296
      %v298 = vrot.slane %v297, 2
      %v299 = vmin.f32 %v297, %v298
      %v300 = vrot.slane %v299, 1
      %v301 = vmin.f32 %v299, %v300
      %s302 = vtos %v301
      %s303 = scalar_lea.smem [#allocation11], 4
      %304 = sst [smem:[%s303]] %s302
      %s305 = scalar_lea.vmem [#allocation3], 16
      %v306 = vld [vmem:[%s305] sm:$0xff]
      %307 = vmax.xlane.f32.xlu0 %v306
      %v308 = vpop.xlane.xlu0 %307
      %v309 = vrot.slane %v308, 4
      %v310 = vmax.f32 %v308, %v309
      %v311 = vrot.slane %v310, 2
      %v312 = vmax.f32 %v310, %v311
      %v313 = vrot.slane %v312, 1
      %v314 = vmax.f32 %v312, %v313
      %s315 = vtos %v314
      %s316 = scalar_lea.smem [#allocation11], 5
      %317 = sst [smem:[%s316]] %s315
    $region32: #{tpu_custom_call.1} parent=1 // pred_fallthru
      _
    // Predicated region
    $region33: #{tpu_custom_call.1} parent=1 // pred_check
      _
    $region34: #{tpu_custom_call.1} parent=1 // pred_check_branch
      %319 = sbr.rel (0) target = $region36
    $region35: #{tpu_custom_call.1} parent=1 // pred_region
      %s321 = ssub.s32 4096, 4096
      %322 = vsyncadd [#allocation6], %s321
      %s323 = sshll.u32 [#allocation10], 4
      %s324 = int_to_ptr.vmem [resolvable:$true] %s323
      %329 = dma.vmem_to_hbm [thread:$0]  %s324, 4096, %s2, [#allocation6], 128, 128, 8
    $region36: #{tpu_custom_call.1} parent=1 // pred_fallthru
      _
    // Predicated region
    $region37: #{tpu_custom_call.1} parent=1 // pred_check
      _
    $region38: #{tpu_custom_call.1} parent=1 // pred_check_branch
      %331 = sbr.rel (0) target = $region40
    $region39: #{tpu_custom_call.1} parent=1 // pred_region
      %s333 = ssub.s32 16, 16
      %334 = vsyncadd [#allocation7], %s333
      %337 = dma.smem_to_hbm [#allocation11], 16, %s3, [#allocation7]
    $region40: #{tpu_custom_call.1} parent=1 // pred_fallthru
      _
    // Predicated region
    $region41: #{tpu_custom_call.1} parent=1 // pred_check
      _
    $region42: #{tpu_custom_call.1} parent=1 // pred_check_branch
      %339 = sbr.rel (0) target = $region44
    $region43: #{tpu_custom_call.1} parent=1 // pred_region
      %340 = dma.done [#allocation6], 4096
    $region44: #{tpu_custom_call.1} parent=1 // pred_fallthru
      _
    // Predicated region
    $region45: #{tpu_custom_call.1} parent=1 // pred_check
      _
    $region46: #{tpu_custom_call.1} parent=1 // pred_check_branch
      %342 = sbr.rel (0) target = $region48
    $region47: #{tpu_custom_call.1} parent=1 // pred_region
      %343 = dma.done [#allocation7], 16
    $region48: #{tpu_custom_call.1} parent=1 // pred_fallthru
      _
    %344 = sfence
    %345 = vsyncpa [#allocation5], 1
    %346 = vsyncpa [#allocation9], 1
    %347 = vsyncpa [#allocation6], 1
    %348 = vsyncpa [#allocation7], 1

</llo_original>
